<compile_context>
chip_gen: v7x
topology: tpu7x:2x2x1
jax: 0.10.0
libtpu: 0.0.40
codegen_flags: <defaults>
</compile_context>

<pallas_src>
import jax
import jax.numpy as jnp
from jax.experimental import pallas as pl
from jax.experimental.pallas import tpu as pltpu

LANE = 128       # lane width: keep last dims multiples of this
SUBLANE = 16     # bf16 packs 16 rows per vreg -> align batch dim to 16


def _round_up(n, m):
    return ((n + m - 1) // m) * m


def _pad2d(a, rows, cols):
    return jnp.pad(a, ((0, rows - a.shape[0]), (0, cols - a.shape[1])))


def fnn_kernel(x_ref, w1_ref, b1_ref, w2_ref, b2_ref,
               w3_ref, b3_ref, w4_ref, b4_ref, o_ref):
    """relu(relu(relu(x@W1+b1)@W2+b2)@W3+b3)@W4+b4 for one batch tile.

    x / W are bf16 (native MXU path); accumulation + bias add in f32; each
    ReLU output is cast back to bf16 in vregs for the next matmul. The final
    result is stored as bf16 (o_ref dtype).
    """
    h = x_ref[...]

    h = jnp.dot(h, w1_ref[...], preferred_element_type=jnp.float32) + b1_ref[...]
    h = jnp.maximum(h, 0.0).astype(jnp.bfloat16)

    h = jnp.dot(h, w2_ref[...], preferred_element_type=jnp.float32) + b2_ref[...]
    h = jnp.maximum(h, 0.0).astype(jnp.bfloat16)

    h = jnp.dot(h, w3_ref[...], preferred_element_type=jnp.float32) + b3_ref[...]
    h = jnp.maximum(h, 0.0).astype(jnp.bfloat16)

    h = jnp.dot(h, w4_ref[...], preferred_element_type=jnp.float32) + b4_ref[...]
    o_ref[...] = h.astype(o_ref.dtype)


def prepare_fnn_params(params):
    """One-time padding + casting of parameters (hoisted out of the hot path).

    params = (w1, b1, w2, b2, w3, b3, w4, b4); weights stored as (in, out).
    Returns (padded_param_tuple, meta) where meta carries the logical and
    padded feature dims needed by fnn_forward.
    """
    w1, b1, w2, b2, w3, b3, w4, b4 = params
    in_f = w1.shape[0]
    out_f = w4.shape[1]

    d_in = _round_up(in_f, LANE)
    d1 = _round_up(w1.shape[1], LANE)
    d2 = _round_up(w2.shape[1], LANE)
    d3 = _round_up(w3.shape[1], LANE)
    d_out = _round_up(out_f, LANE)

    padded = (
        _pad2d(w1, d_in, d1).astype(jnp.bfloat16),
        _pad2d(b1, 1, d1).astype(jnp.float32),
        _pad2d(w2, d1, d2).astype(jnp.bfloat16),
        _pad2d(b2, 1, d2).astype(jnp.float32),
        _pad2d(w3, d2, d3).astype(jnp.bfloat16),
        _pad2d(b3, 1, d3).astype(jnp.float32),
        _pad2d(w4, d3, d_out).astype(jnp.bfloat16),
        _pad2d(b4, 1, d_out).astype(jnp.float32),
    )
    meta = dict(in_f=in_f, out_f=out_f, d_in=d_in, d_out=d_out)
    return padded, meta


def _pick_batch_tiling(batch, batch_tile):
    """Pick (tile_rows, padded_batch). Rows are 16-aligned (bf16 vreg packing).

    * Large batches: `batch_tile`-row tiles (default 1024 -> each grid step
      moves ~0.5 MiB, well past the per-step-overhead regime; VMEM footprint
      stays in the low-MiB range on all generations).
    * Small/medium batches (>= 32 rows): split into exactly 2 equal tiles so
      v7x's second TensorCore has work under dimension_semantics=("parallel",).
    * Tiny batches (< 32 rows): a single 16-aligned tile.
    """
    assert batch_tile % SUBLANE == 0, "batch_tile must be a multiple of 16"
    b_aligned = _round_up(batch, SUBLANE)
    if b_aligned > batch_tile:
        tb = batch_tile
        b_pad = _round_up(batch, tb)
    elif b_aligned >= 2 * SUBLANE:
        tb = _round_up((b_aligned + 1) // 2, SUBLANE)
        b_pad = 2 * tb
    else:
        tb = b_aligned
        b_pad = b_aligned
    return tb, b_pad


def fnn_forward(x, prepared_params, meta, *, batch_tile=1024):
    """Run the fused FNN kernel on pre-padded params.

    Returns a bf16 array of shape (batch, out_f); upcast outside if f32 needed.
    """
    (w1p, b1p, w2p, b2p, w3p, b3p, w4p, b4p) = prepared_params
    batch = x.shape[0]
    in_f, out_f = meta["in_f"], meta["out_f"]
    d_in, d_out = meta["d_in"], meta["d_out"]
    assert x.shape[1] == in_f

    tb, b_pad = _pick_batch_tiling(batch, batch_tile)

    # Single fused pad+convert pass over the activations (only per-call prep).
    xp = _pad2d(x, b_pad, d_in).astype(jnp.bfloat16)

    # Weights/biases: whole (already padded) array resident in VMEM, the same
    # block every grid step -> no per-step re-tiling / re-DMA.
    vmem_resident = pl.BlockSpec(memory_space=pltpu.MemorySpace.VMEM)

    out = pl.pallas_call(
        fnn_kernel,
        out_shape=jax.ShapeDtypeStruct((b_pad, d_out), jnp.bfloat16),
        grid=(b_pad // tb,),
        in_specs=[
            pl.BlockSpec((tb, d_in), lambda i: (i, 0)),   # x tiled over batch
            vmem_resident, vmem_resident,                 # w1, b1
            vmem_resident, vmem_resident,                 # w2, b2
            vmem_resident, vmem_resident,                 # w3, b3
            vmem_resident, vmem_resident,                 # w4, b4
        ],
        out_specs=pl.BlockSpec((tb, d_out), lambda i: (i, 0)),
        compiler_params=pltpu.CompilerParams(
            dimension_semantics=("parallel",),            # both TCs on v7x
        ),
    )(xp, w1p, b1p, w2p, b2p, w3p, b3p, w4p, b4p)

    return out[:batch, :out_f]


def init_linear(key, in_features, out_features):
    """Deterministic init mimicking torch.nn.Linear (uniform +-1/sqrt(fan_in)).

    Weight is returned pre-transposed to (in_features, out_features) so the
    forward is `x @ W + b` (== PyTorch's x @ W_torch.T + b). Bias is (1, out).
    """
    kw, kb = jax.random.split(key)
    bound = 1.0 / (in_features ** 0.5)
    w = jax.random.uniform(kw, (in_features, out_features), jnp.float32,
                           minval=-bound, maxval=bound)
    b = jax.random.uniform(kb, (1, out_features), jnp.float32,
                           minval=-bound, maxval=bound)
    return w, b


def fnn_reference(x, params):
    """Plain-JAX f32 reference for correctness checking."""
    w1, b1, w2, b2, w3, b3, w4, b4 = params
    h = jnp.maximum(x @ w1 + b1, 0.0)
    h = jnp.maximum(h @ w2 + b2, 0.0)
    h = jnp.maximum(h @ w3 + b3, 0.0)
    return h @ w4 + b4


if __name__ == "__main__":
    # Small shapes consistent with the module's forward:
    #   input_size=32, hidden1=64, hidden2=48, hidden3=32, output_size=16
    batch = 8
    input_size, h1, h2, h3, output_size = 32, 64, 48, 32, 16

    key = jax.random.PRNGKey(0)
    kx, k1, k2, k3, k4 = jax.random.split(key, 5)

    x = jax.random.normal(kx, (batch, input_size), jnp.float32)

    w1, b1 = init_linear(k1, input_size, h1)
    w2, b2 = init_linear(k2, h1, h2)
    w3, b3 = init_linear(k3, h2, h3)
    w4, b4 = init_linear(k4, h3, output_size)
    params = (w1, b1, w2, b2, w3, b3, w4, b4)

    # Pad/cast parameters ONCE (outside the per-call hot path).
    prepared, meta = prepare_fnn_params(params)

    out = fnn_forward(x, prepared, meta)
    out = jax.block_until_ready(out)

    ref = fnn_reference(x, params)
    assert out.shape == (batch, output_size)
    # bf16 MXU inputs + bf16 writeback vs f32 reference: relaxed tolerance.
    assert jnp.allclose(out.astype(jnp.float32), ref, atol=5e-2, rtol=5e-2), \
        "mismatch vs reference"

    print("KERNEL_OK")
</pallas_src>

<mosaic_0001>
module attributes {stable_mosaic.version = 11 : i64} {
  func.func @fnn_kernel(%arg0: i32, %arg1: memref<16x128xbf16, #tpu.memory_space<vmem>>, %arg2: memref<128x128xbf16, #tpu.memory_space<vmem>>, %arg3: memref<1x128xf32, #tpu.memory_space<vmem>>, %arg4: memref<128x128xbf16, #tpu.memory_space<vmem>>, %arg5: memref<1x128xf32, #tpu.memory_space<vmem>>, %arg6: memref<128x128xbf16, #tpu.memory_space<vmem>>, %arg7: memref<1x128xf32, #tpu.memory_space<vmem>>, %arg8: memref<128x128xbf16, #tpu.memory_space<vmem>>, %arg9: memref<1x128xf32, #tpu.memory_space<vmem>>, %arg10: memref<16x128xbf16, #tpu.memory_space<vmem>>) attributes {dimension_semantics = [#tpu.dimension_semantics<parallel>], iteration_bounds = array<i64: 1>, scalar_prefetch = 0 : i64, scratch_operands = 0 : i64, tpu.core_type = #tpu.core_type<tc>, window_params = [{transform_indices = @transform_0, window_bounds = array<i64: 16, 128>}, {pipeline_mode = #tpu.pipeline_mode<synchronous>, transform_indices = @transform_1, window_bounds = array<i64: 128, 128>}, {pipeline_mode = #tpu.pipeline_mode<synchronous>, transform_indices = @transform_2, window_bounds = array<i64: 1, 128>}, {pipeline_mode = #tpu.pipeline_mode<synchronous>, transform_indices = @transform_3, window_bounds = array<i64: 128, 128>}, {pipeline_mode = #tpu.pipeline_mode<synchronous>, transform_indices = @transform_4, window_bounds = array<i64: 1, 128>}, {pipeline_mode = #tpu.pipeline_mode<synchronous>, transform_indices = @transform_5, window_bounds = array<i64: 128, 128>}, {pipeline_mode = #tpu.pipeline_mode<synchronous>, transform_indices = @transform_6, window_bounds = array<i64: 1, 128>}, {pipeline_mode = #tpu.pipeline_mode<synchronous>, transform_indices = @transform_7, window_bounds = array<i64: 128, 128>}, {pipeline_mode = #tpu.pipeline_mode<synchronous>, transform_indices = @transform_8, window_bounds = array<i64: 1, 128>}, {transform_indices = @transform_9, window_bounds = array<i64: 16, 128>}]} {
    %c0 = arith.constant 0 : index
    %c0_0 = arith.constant 0 : index
    %0 = vector.load %arg1[%c0, %c0_0] : memref<16x128xbf16, #tpu.memory_space<vmem>>, vector<16x128xbf16>
    %c0_1 = arith.constant 0 : index
    %c0_2 = arith.constant 0 : index
    %1 = vector.load %arg2[%c0_1, %c0_2] : memref<128x128xbf16, #tpu.memory_space<vmem>>, vector<128x128xbf16>
    %cst = arith.constant dense<0.000000e+00> : vector<16x128xf32>
    %2 = tpu.matmul %0, %1, %cst {dimension_numbers = #tpu.dot_dimension_numbers<[1], [0], [0], [1], [0, 0, 1, 1], [], []>} : vector<16x128xbf16>, vector<128x128xbf16>, vector<16x128xf32> -> vector<16x128xf32>
    %c0_3 = arith.constant 0 : index
    %c0_4 = arith.constant 0 : index
    %3 = vector.load %arg3[%c0_3, %c0_4] : memref<1x128xf32, #tpu.memory_space<vmem>>, vector<1x128xf32>
    %4 = vector.broadcast %3 : vector<1x128xf32> to vector<16x128xf32>
    %5 = arith.addf %2, %4 : vector<16x128xf32>
    %cst_5 = arith.constant 0.000000e+00 : f32
    %6 = vector.broadcast %cst_5 : f32 to vector<16x128xf32>
    %7 = arith.maximumf %5, %6 : vector<16x128xf32>
    %8 = arith.truncf %7 : vector<16x128xf32> to vector<16x128xbf16>
    %c0_6 = arith.constant 0 : index
    %c0_7 = arith.constant 0 : index
    %9 = vector.load %arg4[%c0_6, %c0_7] : memref<128x128xbf16, #tpu.memory_space<vmem>>, vector<128x128xbf16>
    %cst_8 = arith.constant dense<0.000000e+00> : vector<16x128xf32>
    %10 = tpu.matmul %8, %9, %cst_8 {dimension_numbers = #tpu.dot_dimension_numbers<[1], [0], [0], [1], [0, 0, 1, 1], [], []>} : vector<16x128xbf16>, vector<128x128xbf16>, vector<16x128xf32> -> vector<16x128xf32>
    %c0_9 = arith.constant 0 : index
    %c0_10 = arith.constant 0 : index
    %11 = vector.load %arg5[%c0_9, %c0_10] : memref<1x128xf32, #tpu.memory_space<vmem>>, vector<1x128xf32>
    %12 = vector.broadcast %11 : vector<1x128xf32> to vector<16x128xf32>
    %13 = arith.addf %10, %12 : vector<16x128xf32>
    %cst_11 = arith.constant 0.000000e+00 : f32
    %14 = vector.broadcast %cst_11 : f32 to vector<16x128xf32>
    %15 = arith.maximumf %13, %14 : vector<16x128xf32>
    %16 = arith.truncf %15 : vector<16x128xf32> to vector<16x128xbf16>
    %c0_12 = arith.constant 0 : index
    %c0_13 = arith.constant 0 : index
    %17 = vector.load %arg6[%c0_12, %c0_13] : memref<128x128xbf16, #tpu.memory_space<vmem>>, vector<128x128xbf16>
    %cst_14 = arith.constant dense<0.000000e+00> : vector<16x128xf32>
    %18 = tpu.matmul %16, %17, %cst_14 {dimension_numbers = #tpu.dot_dimension_numbers<[1], [0], [0], [1], [0, 0, 1, 1], [], []>} : vector<16x128xbf16>, vector<128x128xbf16>, vector<16x128xf32> -> vector<16x128xf32>
    %c0_15 = arith.constant 0 : index
    %c0_16 = arith.constant 0 : index
    %19 = vector.load %arg7[%c0_15, %c0_16] : memref<1x128xf32, #tpu.memory_space<vmem>>, vector<1x128xf32>
    %20 = vector.broadcast %19 : vector<1x128xf32> to vector<16x128xf32>
    %21 = arith.addf %18, %20 : vector<16x128xf32>
    %cst_17 = arith.constant 0.000000e+00 : f32
    %22 = vector.broadcast %cst_17 : f32 to vector<16x128xf32>
    %23 = arith.maximumf %21, %22 : vector<16x128xf32>
    %24 = arith.truncf %23 : vector<16x128xf32> to vector<16x128xbf16>
    %c0_18 = arith.constant 0 : index
    %c0_19 = arith.constant 0 : index
    %25 = vector.load %arg8[%c0_18, %c0_19] : memref<128x128xbf16, #tpu.memory_space<vmem>>, vector<128x128xbf16>
    %cst_20 = arith.constant dense<0.000000e+00> : vector<16x128xf32>
    %26 = tpu.matmul %24, %25, %cst_20 {dimension_numbers = #tpu.dot_dimension_numbers<[1], [0], [0], [1], [0, 0, 1, 1], [], []>} : vector<16x128xbf16>, vector<128x128xbf16>, vector<16x128xf32> -> vector<16x128xf32>
    %c0_21 = arith.constant 0 : index
    %c0_22 = arith.constant 0 : index
    %27 = vector.load %arg9[%c0_21, %c0_22] : memref<1x128xf32, #tpu.memory_space<vmem>>, vector<1x128xf32>
    %28 = vector.broadcast %27 : vector<1x128xf32> to vector<16x128xf32>
    %29 = arith.addf %26, %28 : vector<16x128xf32>
    %30 = arith.truncf %29 : vector<16x128xf32> to vector<16x128xbf16>
    %c0_23 = arith.constant 0 : index
    %c0_24 = arith.constant 0 : index
    %31 = vector.load %arg10[%c0_23, %c0_24] : memref<16x128xbf16, #tpu.memory_space<vmem>>, vector<16x128xbf16>
    tpu.vector_store %arg10[%c0_23, %c0_24], %30 {strides = array<i32>} : memref<16x128xbf16, #tpu.memory_space<vmem>>, vector<16x128xbf16>,
    return
  }
  func.func @transform_0(%arg0: i32) -> (i32, i32) {
    %c0_i32 = arith.constant 0 : i32
    %c0_i32_0 = arith.constant 0 : i32
    return %arg0, %c0_i32 : i32, i32
  }
  func.func @transform_1(%arg0: i32) -> (i32, i32) {
    %c0_i32 = arith.constant 0 : i32
    %c0_i32_0 = arith.constant 0 : i32
    %c0_i32_1 = arith.constant 0 : i32
    return %c0_i32, %c0_i32_0 : i32, i32
  }
  func.func @transform_2(%arg0: i32) -> (i32, i32) {
    %c0_i32 = arith.constant 0 : i32
    %c0_i32_0 = arith.constant 0 : i32
    %c0_i32_1 = arith.constant 0 : i32
    return %c0_i32, %c0_i32_0 : i32, i32
  }
  func.func @transform_3(%arg0: i32) -> (i32, i32) {
    %c0_i32 = arith.constant 0 : i32
    %c0_i32_0 = arith.constant 0 : i32
    %c0_i32_1 = arith.constant 0 : i32
    return %c0_i32, %c0_i32_0 : i32, i32
  }
  func.func @transform_4(%arg0: i32) -> (i32, i32) {
    %c0_i32 = arith.constant 0 : i32
    %c0_i32_0 = arith.constant 0 : i32
    %c0_i32_1 = arith.constant 0 : i32
    return %c0_i32, %c0_i32_0 : i32, i32
  }
  func.func @transform_5(%arg0: i32) -> (i32, i32) {
    %c0_i32 = arith.constant 0 : i32
    %c0_i32_0 = arith.constant 0 : i32
    %c0_i32_1 = arith.constant 0 : i32
    return %c0_i32, %c0_i32_0 : i32, i32
  }
  func.func @transform_6(%arg0: i32) -> (i32, i32) {
    %c0_i32 = arith.constant 0 : i32
    %c0_i32_0 = arith.constant 0 : i32
    %c0_i32_1 = arith.constant 0 : i32
    return %c0_i32, %c0_i32_0 : i32, i32
  }
  func.func @transform_7(%arg0: i32) -> (i32, i32) {
    %c0_i32 = arith.constant 0 : i32
    %c0_i32_0 = arith.constant 0 : i32
    %c0_i32_1 = arith.constant 0 : i32
    return %c0_i32, %c0_i32_0 : i32, i32
  }
  func.func @transform_8(%arg0: i32) -> (i32, i32) {
    %c0_i32 = arith.constant 0 : i32
    %c0_i32_0 = arith.constant 0 : i32
    %c0_i32_1 = arith.constant 0 : i32
    return %c0_i32, %c0_i32_0 : i32, i32
  }
  func.func @transform_9(%arg0: i32) -> (i32, i32) {
    %c0_i32 = arith.constant 0 : i32
    %c0_i32_0 = arith.constant 0 : i32
    return %arg0, %c0_i32 : i32, i32
  }
}

</mosaic_0001>

<llo_original>
// kernel: tpu_custom_call.1
$region0: #{tpu_custom_call.1}
  #allocation0 [shape = 'u32[]', space=smem, size = 0x4, offset = 0x4, fixed_abs, tag = 'smem constant byte address 0x4 - core index']
  #allocation1 [shape = 'u32[144,128]{1,0:T(1,128)}', space=vmem, size = 0x12000, scoped, tag = 'internal scratch']
  %s0 = inlined_call_operand.hbm [shape: bf16[16,128], index: 0, kind: input, shape index: {}]
  %s1 = inlined_call_operand.hbm [shape: bf16[128,128], index: 1, kind: input, shape index: {}]
  %s2 = inlined_call_operand.vmem [shape: f32[1,128], index: 2, kind: input, shape index: {}]
  %s3 = inlined_call_operand.hbm [shape: bf16[128,128], index: 3, kind: input, shape index: {}]
  %s4 = inlined_call_operand.vmem [shape: f32[1,128], index: 4, kind: input, shape index: {}]
  %s5 = inlined_call_operand.hbm [shape: bf16[128,128], index: 5, kind: input, shape index: {}]
  %s6 = inlined_call_operand.vmem [shape: f32[1,128], index: 6, kind: input, shape index: {}]
  %s7 = inlined_call_operand.hbm [shape: bf16[128,128], index: 7, kind: input, shape index: {}]
  %s8 = inlined_call_operand.vmem [shape: f32[1,128], index: 8, kind: input, shape index: {}]
  %s9 = inlined_call_operand.hbm [shape: bf16[16,128], index: 9, kind: output, shape index: {}]
  %s10 = sld [smem:[#allocation0]]
  $region66: #{tpu_custom_call.1} parent=0
    _
  %s12 = ssub.s32 1, %s10
  %s13 = scalar_select 0, %s12, %s10
  $region1: #{tpu_custom_call.1} parent=0
    #allocation2 [shape = 'u8[4096]{0}', space=vmem, size = 0x1000, scoped, tag = 'input window, operand 0, single buffered']
    #allocation3 [shape = 's32[1]{0}', space=sflag, size = 0x4, scoped, tag = 'scoped memory for tpu_custom_call.1']
    #allocation4 [shape = 's32[1]{0}', space=sflag, size = 0x4, scoped, tag = 'scoped memory for tpu_custom_call.1']
    #allocation5 [shape = 'u8[32768]{0}', space=vmem, size = 0x8000, scoped, tag = 'input window, operand 1, single buffered']
    #allocation6 [shape = 's32[1]{0}', space=sflag, size = 0x4, scoped, tag = 'scoped memory for tpu_custom_call.1']
    #allocation7 [shape = 'u8[32768]{0}', space=vmem, size = 0x8000, scoped, tag = 'input window, operand 3, single buffered']
    #allocation8 [shape = 'u8[32768]{0}', space=vmem, size = 0x8000, scoped, tag = 'input window, operand 5, single buffered']
    #allocation9 [shape = 's32[1]{0}', space=sflag, size = 0x4, scoped, tag = 'scoped memory for tpu_custom_call.1']
    #allocation10 [shape = 'u8[32768]{0}', space=vmem, size = 0x8000, scoped, tag = 'input window, operand 7, single buffered']
    #allocation11 [shape = 'u8[4096]{0}', space=vmem, size = 0x1000, scoped, tag = 'output window, operand 0, single buffered']
    %14 = vsyncpa [#allocation3], 0
    %15 = vsyncpa [#allocation6], 0
    %16 = vsyncpa [#allocation9], 0
    %17 = vsyncpa [#allocation4], 0
    // Predicated region
    $region2: #{tpu_custom_call.1} parent=1 // pred_check
      _
    $region3: #{tpu_custom_call.1} parent=1 // pred_check_branch
      %19 = sbr.rel (0) target = $region5
    $region4: #{tpu_custom_call.1} parent=1 // pred_region
      %s21 = ssub.s32 128, 128
      %22 = vsyncadd [#allocation3], %s21
      %s23 = sshll.u32 [#allocation2], 4
      %s24 = int_to_ptr.vmem [resolvable:$true] %s23
      %29 = dma.hbm_to_vmem [thread:$0]  %s0, 128, %s24, [#allocation3], 64, 64, 4
    $region5: #{tpu_custom_call.1} parent=1 // pred_fallthru
      _
    // Predicated region
    $region6: #{tpu_custom_call.1} parent=1 // pred_check
      _
    $region7: #{tpu_custom_call.1} parent=1 // pred_check_branch
      %31 = sbr.rel (0) target = $region9
    $region8: #{tpu_custom_call.1} parent=1 // pred_region
      %s33 = ssub.s32 1024, 1024
      %34 = vsyncadd [#allocation6], %s33
      %s35 = sshll.u32 [#allocation5], 4
      %s36 = int_to_ptr.vmem [resolvable:$true] %s35
      %41 = dma.hbm_to_vmem [thread:$0]  %s1, 1024, %s36, [#allocation6], 64, 64, 4
    $region9: #{tpu_custom_call.1} parent=1 // pred_fallthru
      _
    // Predicated region
    $region10: #{tpu_custom_call.1} parent=1 // pred_check
      _
    $region11: #{tpu_custom_call.1} parent=1 // pred_check_branch
      %43 = sbr.rel (0) target = $region13
    $region12: #{tpu_custom_call.1} parent=1 // pred_region
      _
    $region13: #{tpu_custom_call.1} parent=1 // pred_fallthru
      _
    // Predicated region
    $region14: #{tpu_custom_call.1} parent=1 // pred_check
      _
    $region15: #{tpu_custom_call.1} parent=1 // pred_check_branch
      %45 = sbr.rel (0) target = $region17
    $region16: #{tpu_custom_call.1} parent=1 // pred_region
      %s47 = ssub.s32 1024, 1024
      %48 = vsyncadd [#allocation6], %s47
      %s49 = sshll.u32 [#allocation7], 4
      %s50 = int_to_ptr.vmem [resolvable:$true] %s49
      %55 = dma.hbm_to_vmem [thread:$0]  %s3, 1024, %s50, [#allocation6], 64, 64, 4
    $region17: #{tpu_custom_call.1} parent=1 // pred_fallthru
      _
    // Predicated region
    $region18: #{tpu_custom_call.1} parent=1 // pred_check
      _
    $region19: #{tpu_custom_call.1} parent=1 // pred_check_branch
      %57 = sbr.rel (0) target = $region21
    $region20: #{tpu_custom_call.1} parent=1 // pred_region
      _
    $region21: #{tpu_custom_call.1} parent=1 // pred_fallthru
      _
    // Predicated region
    $region22: #{tpu_custom_call.1} parent=1 // pred_check
      _
    $region23: #{tpu_custom_call.1} parent=1 // pred_check_branch
      %59 = sbr.rel (0) target = $region25
    $region24: #{tpu_custom_call.1} parent=1 // pred_region
      %s61 = ssub.s32 1024, 1024
      %62 = vsyncadd [#allocation9], %s61
      %s63 = sshll.u32 [#allocation8], 4
      %s64 = int_to_ptr.vmem [resolvable:$true] %s63
      %69 = dma.hbm_to_vmem [thread:$0]  %s5, 1024, %s64, [#allocation9], 64, 64, 4
    $region25: #{tpu_custom_call.1} parent=1 // pred_fallthru
      _
    // Predicated region
    $region26: #{tpu_custom_call.1} parent=1 // pred_check
      _
    $region27: #{tpu_custom_call.1} parent=1 // pred_check_branch
      %71 = sbr.rel (0) target = $region29
    $region28: #{tpu_custom_call.1} parent=1 // pred_region
      _
    $region29: #{tpu_custom_call.1} parent=1 // pred_fallthru
      _
    // Predicated region
    $region30: #{tpu_custom_call.1} parent=1 // pred_check
      _
    $region31: #{tpu_custom_call.1} parent=1 // pred_check_branch
      %73 = sbr.rel (0) target = $region33
    $region32: #{tpu_custom_call.1} parent=1 // pred_region
      %s75 = ssub.s32 1024, 1024
      %76 = vsyncadd [#allocation9], %s75
      %s77 = sshll.u32 [#allocation10], 4
      %s78 = int_to_ptr.vmem [resolvable:$true] %s77
      %83 = dma.hbm_to_vmem [thread:$0]  %s7, 1024, %s78, [#allocation9], 64, 64, 4
    $region33: #{tpu_custom_call.1} parent=1 // pred_fallthru
      _
    // Predicated region
    $region34: #{tpu_custom_call.1} parent=1 // pred_check
      _
    $region35: #{tpu_custom_call.1} parent=1 // pred_check_branch
      %85 = sbr.rel (0) target = $region37
    $region36: #{tpu_custom_call.1} parent=1 // pred_region
      _
    $region37: #{tpu_custom_call.1} parent=1 // pred_fallthru
      _
    // Predicated region
    $region38: #{tpu_custom_call.1} parent=1 // pred_check
      _
    $region39: #{tpu_custom_call.1} parent=1 // pred_check_branch
      %87 = sbr.rel (0) target = $region41
    $region40: #{tpu_custom_call.1} parent=1 // pred_region
      %88 = dma.done [#allocation3], 128
    $region41: #{tpu_custom_call.1} parent=1 // pred_fallthru
      _
    // Predicated region
    $region42: #{tpu_custom_call.1} parent=1 // pred_check
      _
    $region43: #{tpu_custom_call.1} parent=1 // pred_check_branch
      %90 = sbr.rel (0) target = $region45
    $region44: #{tpu_custom_call.1} parent=1 // pred_region
      %91 = dma.done [#allocation6], 1024
    $region45: #{tpu_custom_call.1} parent=1 // pred_fallthru
      _
    // Predicated region
    $region46: #{tpu_custom_call.1} parent=1 // pred_check
      _
    $region47: #{tpu_custom_call.1} parent=1 // pred_check_branch
      %93 = sbr.rel (0) target = $region49
    $region48: #{tpu_custom_call.1} parent=1 // pred_region
      %94 = dma.done [#allocation6], 1024
    $region49: #{tpu_custom_call.1} parent=1 // pred_fallthru
      _
    // Predicated region
    $region50: #{tpu_custom_call.1} parent=1 // pred_check
      _
    $region51: #{tpu_custom_call.1} parent=1 // pred_check_branch
      %96 = sbr.rel (0) target = $region53
    $region52: #{tpu_custom_call.1} parent=1 // pred_region
      %97 = dma.done [#allocation9], 1024
    $region53: #{tpu_custom_call.1} parent=1 // pred_fallthru
      _
    // Predicated region
    $region54: #{tpu_custom_call.1} parent=1 // pred_check
      _
    $region55: #{tpu_custom_call.1} parent=1 // pred_check_branch
      %99 = sbr.rel (0) target = $region57
    $region56: #{tpu_custom_call.1} parent=1 // pred_region
      %100 = dma.done [#allocation9], 1024
    $region57: #{tpu_custom_call.1} parent=1 // pred_fallthru
      _
    %v102 = vld [vmem:[#allocation2] sm:$0xf]
    %v103 = vld [vmem:[#allocation2 + $0x4] sm:$0xf]
    %v104 = vld [vmem:[#allocation5] sm:$0xf]
    %v105 = vld [vmem:[#allocation5 + $0x4] sm:$0xf]
    %v106 = vld [vmem:[#allocation5 + $0x8] sm:$0xf]
    %v107 = vld [vmem:[#allocation5 + $0xc] sm:$0xf]
    %v108 = vld [vmem:[#allocation5 + $0x10] sm:$0xf]
    %v109 = vld [vmem:[#allocation5 + $0x14] sm:$0xf]
    %v110 = vld [vmem:[#allocation5 + $0x18] sm:$0xf]
    %v111 = vld [vmem:[#allocation5 + $0x1c] sm:$0xf]
    %v112 = vld [vmem:[#allocation5 + $0x20] sm:$0xf]
    %v113 = vld [vmem:[#allocation5 + $0x24] sm:$0xf]
    %v114 = vld [vmem:[#allocation5 + $0x28] sm:$0xf]
    %v115 = vld [vmem:[#allocation5 + $0x2c] sm:$0xf]
    %v116 = vld [vmem:[#allocation5 + $0x30] sm:$0xf]
    %v117 = vld [vmem:[#allocation5 + $0x34] sm:$0xf]
    %v118 = vld [vmem:[#allocation5 + $0x38] sm:$0xf]
    %v119 = vld [vmem:[#allocation5 + $0x3c] sm:$0xf]
    %v120 = vld [vmem:[%s2] sm:$0x1]
    %v122 = vlaneseq
    %v123 = vshrl.u32 %v122, 7
    %v124 = vsub.s32 0, %v123
    %v125 = vrot.slane %v120, %v124
    %v129 = vunpack.c.l.b16 %v102
    %v130 = vunpack.c.l.b16 %v103
    %v131 = vpack.c.b16 %v130, %v129
    %v149 = vunpack.c.l.b16 %v104
    %v150 = vunpack.c.l.b16 %v105
    %v151 = vunpack.c.l.b16 %v106
    %v152 = vunpack.c.l.b16 %v107
    %v153 = vunpack.c.l.b16 %v108
    %v154 = vunpack.c.l.b16 %v109
    %v155 = vunpack.c.l.b16 %v110
    %v156 = vunpack.c.l.b16 %v111
    %v157 = vunpack.c.l.b16 %v112
    %v158 = vunpack.c.l.b16 %v113
    %v159 = vunpack.c.l.b16 %v114
    %v160 = vunpack.c.l.b16 %v115
    %v161 = vunpack.c.l.b16 %v116
    %v162 = vunpack.c.l.b16 %v117
    %v163 = vunpack.c.l.b16 %v118
    %v164 = vunpack.c.l.b16 %v119
    %v165 = vpack.c.b16 %v150, %v149
    %v166 = vpack.c.b16 %v152, %v151
    %v167 = vpack.c.b16 %v154, %v153
    %v168 = vpack.c.b16 %v156, %v155
    %v169 = vpack.c.b16 %v158, %v157
    %v170 = vpack.c.b16 %v160, %v159
    %v171 = vpack.c.b16 %v162, %v161
    %v172 = vpack.c.b16 %v164, %v163
    %181 = vmatprep.subr.bf16.mxu0 0
    %182 = vmatpush1.bf16.msra.mxu0 %v165
    %183 = vmatprep.subr.bf16.mxu0 0
    %184 = vmatpush1.bf16.msra.mxu0 %v166
    %185 = vmatprep.subr.bf16.mxu0 0
    %186 = vmatpush1.bf16.msra.mxu0 %v167
    %187 = vmatprep.subr.bf16.mxu0 0
    %188 = vmatpush1.bf16.msra.mxu0 %v168
    %189 = vmatprep.subr.bf16.mxu0 0
    %190 = vmatpush1.bf16.msra.mxu0 %v169
    %191 = vmatprep.subr.bf16.mxu0 0
    %192 = vmatpush1.bf16.msra.mxu0 %v170
    %193 = vmatprep.subr.bf16.mxu0 0
    %194 = vmatpush1.bf16.msra.mxu0 %v171
    %195 = vmatprep.subr.bf16.mxu0 0
    %196 = vmatpush1.bf16.msra.mxu0 %v172
    %197 = vmatprep.subr.bf16.mxu0 0
    %198 = vmatpush1.bf16.msra.mxu0 0
    %199 = vmatprep.subr.bf16.mxu0 0
    %200 = vmatpush1.bf16.msra.mxu0 0
    %201 = vmatprep.subr.bf16.mxu0 0
    %202 = vmatpush1.bf16.msra.mxu0 0
    %203 = vmatprep.subr.bf16.mxu0 0
    %204 = vmatpush1.bf16.msra.mxu0 0
    %205 = vmatprep.subr.bf16.mxu0 0
    %206 = vmatpush1.bf16.msra.mxu0 0
    %207 = vmatprep.subr.bf16.mxu0 0
    %208 = vmatpush1.bf16.msra.mxu0 0
    %209 = vmatprep.subr.bf16.mxu0 0
    %210 = vmatpush1.bf16.msra.mxu0 0
    %211 = vmatprep.subr.bf16.mxu0 0
    %212 = vmatpush1.bf16.msra.mxu0 0
    %213 = vmatprep.mubr.bf16.mxu0 0
    %214 = vmatmul.mubr.bf16.gmra.mrb[0].mxu0 %v131
    %v215 = vpop.f32.mrb[0].mxu0
    %v216 = vadd.f32 %v125, %v215
    %v217 = vpop.f32.mrb[0].mxu0
    %v218 = vpop.f32.mrb[0].mxu0
    %v219 = vadd.f32 %v125, %v218
    %v220 = vpop.f32.mrb[0].mxu0
    %221 = vdwg.mxu0
    %v222 = vmax.f32 %v216, 0.0
    %v223 = vmax.f32 %v219, 0.0
    %v224 = vpack.c.bf16 %v223, %v222
    %v225 = vld [vmem:[#allocation7] sm:$0xf]
    %v226 = vld [vmem:[#allocation7 + $0x4] sm:$0xf]
    %v227 = vld [vmem:[#allocation7 + $0x8] sm:$0xf]
    %v228 = vld [vmem:[#allocation7 + $0xc] sm:$0xf]
    %v229 = vld [vmem:[#allocation7 + $0x10] sm:$0xf]
    %v230 = vld [vmem:[#allocation7 + $0x14] sm:$0xf]
    %v231 = vld [vmem:[#allocation7 + $0x18] sm:$0xf]
    %v232 = vld [vmem:[#allocation7 + $0x1c] sm:$0xf]
    %v233 = vld [vmem:[#allocation7 + $0x20] sm:$0xf]
    %v234 = vld [vmem:[#allocation7 + $0x24] sm:$0xf]
    %v235 = vld [vmem:[#allocation7 + $0x28] sm:$0xf]
    %v236 = vld [vmem:[#allocation7 + $0x2c] sm:$0xf]
    %v237 = vld [vmem:[#allocation7 + $0x30] sm:$0xf]
    %v238 = vld [vmem:[#allocation7 + $0x34] sm:$0xf]
    %v239 = vld [vmem:[#allocation7 + $0x38] sm:$0xf]
    %v240 = vld [vmem:[#allocation7 + $0x3c] sm:$0xf]
    %v241 = vld [vmem:[%s4] sm:$0x1]
    %v243 = vlaneseq
    %v244 = vshrl.u32 %v243, 7
    %v245 = vsub.s32 0, %v244
    %v246 = vrot.slane %v241, %v245
    %v264 = vunpack.c.l.b16 %v225
    %v265 = vunpack.c.l.b16 %v226
    %v266 = vunpack.c.l.b16 %v227
    %v267 = vunpack.c.l.b16 %v228
    %v268 = vunpack.c.l.b16 %v229
    %v269 = vunpack.c.l.b16 %v230
    %v270 = vunpack.c.l.b16 %v231
    %v271 = vunpack.c.l.b16 %v232
    %v272 = vunpack.c.l.b16 %v233
    %v273 = vunpack.c.l.b16 %v234
    %v274 = vunpack.c.l.b16 %v235
    %v275 = vunpack.c.l.b16 %v236
    %v276 = vunpack.c.l.b16 %v237
    %v277 = vunpack.c.l.b16 %v238
    %v278 = vunpack.c.l.b16 %v239
    %v279 = vunpack.c.l.b16 %v240
    %v280 = vpack.c.b16 %v265, %v264
    %v281 = vpack.c.b16 %v267, %v266
    %v282 = vpack.c.b16 %v269, %v268
    %v283 = vpack.c.b16 %v271, %v270
    %v284 = vpack.c.b16 %v273, %v272
    %v285 = vpack.c.b16 %v275, %v274
    %v286 = vpack.c.b16 %v277, %v276
    %v287 = vpack.c.b16 %v279, %v278
    %296 = vmatprep.subr.bf16.mxu0 0
    %297 = vmatpush1.bf16.msra.mxu0 %v280
    %298 = vmatprep.subr.bf16.mxu0 0
    %299 = vmatpush1.bf16.msra.mxu0 %v281
    %300 = vmatprep.subr.bf16.mxu0 0
    %301 = vmatpush1.bf16.msra.mxu0 %v282
    %302 = vmatprep.subr.bf16.mxu0 0
    %303 = vmatpush1.bf16.msra.mxu0 %v283
    %304 = vmatprep.subr.bf16.mxu0 0
    %305 = vmatpush1.bf16.msra.mxu0 %v284
    %306 = vmatprep.subr.bf16.mxu0 0
    %307 = vmatpush1.bf16.msra.mxu0 %v285
    %308 = vmatprep.subr.bf16.mxu0 0
    %309 = vmatpush1.bf16.msra.mxu0 %v286
    %310 = vmatprep.subr.bf16.mxu0 0
    %311 = vmatpush1.bf16.msra.mxu0 %v287
    %312 = vmatprep.subr.bf16.mxu0 0
    %313 = vmatpush1.bf16.msra.mxu0 0
    %314 = vmatprep.subr.bf16.mxu0 0
    %315 = vmatpush1.bf16.msra.mxu0 0
    %316 = vmatprep.subr.bf16.mxu0 0
    %317 = vmatpush1.bf16.msra.mxu0 0
    %318 = vmatprep.subr.bf16.mxu0 0
    %319 = vmatpush1.bf16.msra.mxu0 0
    %320 = vmatprep.subr.bf16.mxu0 0
    %321 = vmatpush1.bf16.msra.mxu0 0
    %322 = vmatprep.subr.bf16.mxu0 0
    %323 = vmatpush1.bf16.msra.mxu0 0
    %324 = vmatprep.subr.bf16.mxu0 0
    %325 = vmatpush1.bf16.msra.mxu0 0
    %326 = vmatprep.subr.bf16.mxu0 0
    %327 = vmatpush1.bf16.msra.mxu0 0
    %328 = vmatprep.mubr.bf16.mxu0 0
    %329 = vmatmul.mubr.bf16.gmra.mrb[0].mxu0 %v224
    %v330 = vpop.f32.mrb[0].mxu0
    %v331 = vadd.f32 %v246, %v330
    %v332 = vpop.f32.mrb[0].mxu0
    %v333 = vpop.f32.mrb[0].mxu0
    %v334 = vadd.f32 %v246, %v333
    %v335 = vpop.f32.mrb[0].mxu0
    %336 = vdwg.mxu0
    %v337 = vmax.f32 %v331, 0.0
    %v338 = vmax.f32 %v334, 0.0
    %v339 = vpack.c.bf16 %v338, %v337
    %v340 = vld [vmem:[#allocation8] sm:$0xf]
    %v341 = vld [vmem:[#allocation8 + $0x4] sm:$0xf]
    %v342 = vld [vmem:[#allocation8 + $0x8] sm:$0xf]
    %v343 = vld [vmem:[#allocation8 + $0xc] sm:$0xf]
    %v344 = vld [vmem:[#allocation8 + $0x10] sm:$0xf]
    %v345 = vld [vmem:[#allocation8 + $0x14] sm:$0xf]
    %v346 = vld [vmem:[#allocation8 + $0x18] sm:$0xf]
    %v347 = vld [vmem:[#allocation8 + $0x1c] sm:$0xf]
    %v348 = vld [vmem:[#allocation8 + $0x20] sm:$0xf]
    %v349 = vld [vmem:[#allocation8 + $0x24] sm:$0xf]
    %v350 = vld [vmem:[#allocation8 + $0x28] sm:$0xf]
    %v351 = vld [vmem:[#allocation8 + $0x2c] sm:$0xf]
    %v352 = vld [vmem:[#allocation8 + $0x30] sm:$0xf]
    %v353 = vld [vmem:[#allocation8 + $0x34] sm:$0xf]
    %v354 = vld [vmem:[#allocation8 + $0x38] sm:$0xf]
    %v355 = vld [vmem:[#allocation8 + $0x3c] sm:$0xf]
    %v356 = vld [vmem:[%s6] sm:$0x1]
    %v358 = vlaneseq
    %v359 = vshrl.u32 %v358, 7
    %v360 = vsub.s32 0, %v359
    %v361 = vrot.slane %v356, %v360
    %v379 = vunpack.c.l.b16 %v340
    %v380 = vunpack.c.l.b16 %v341
    %v381 = vunpack.c.l.b16 %v342
    %v382 = vunpack.c.l.b16 %v343
    %v383 = vunpack.c.l.b16 %v344
    %v384 = vunpack.c.l.b16 %v345
    %v385 = vunpack.c.l.b16 %v346
    %v386 = vunpack.c.l.b16 %v347
    %v387 = vunpack.c.l.b16 %v348
    %v388 = vunpack.c.l.b16 %v349
    %v389 = vunpack.c.l.b16 %v350
    %v390 = vunpack.c.l.b16 %v351
    %v391 = vunpack.c.l.b16 %v352
    %v392 = vunpack.c.l.b16 %v353
    %v393 = vunpack.c.l.b16 %v354
    %v394 = vunpack.c.l.b16 %v355
    %v395 = vpack.c.b16 %v380, %v379
    %v396 = vpack.c.b16 %v382, %v381
    %v397 = vpack.c.b16 %v384, %v383
    %v398 = vpack.c.b16 %v386, %v385
    %v399 = vpack.c.b16 %v388, %v387
    %v400 = vpack.c.b16 %v390, %v389
    %v401 = vpack.c.b16 %v392, %v391
    %v402 = vpack.c.b16 %v394, %v393
    %411 = vmatprep.subr.bf16.mxu0 0
    %412 = vmatpush1.bf16.msra.mxu0 %v395
    %413 = vmatprep.subr.bf16.mxu0 0
    %414 = vmatpush1.bf16.msra.mxu0 %v396
    %415 = vmatprep.subr.bf16.mxu0 0
    %416 = vmatpush1.bf16.msra.mxu0 %v397
    %417 = vmatprep.subr.bf16.mxu0 0
    %418 = vmatpush1.bf16.msra.mxu0 %v398
    %419 = vmatprep.subr.bf16.mxu0 0
    %420 = vmatpush1.bf16.msra.mxu0 %v399
    %421 = vmatprep.subr.bf16.mxu0 0
    %422 = vmatpush1.bf16.msra.mxu0 %v400
    %423 = vmatprep.subr.bf16.mxu0 0
    %424 = vmatpush1.bf16.msra.mxu0 %v401
    %425 = vmatprep.subr.bf16.mxu0 0
    %426 = vmatpush1.bf16.msra.mxu0 %v402
    %427 = vmatprep.subr.bf16.mxu0 0
    %428 = vmatpush1.bf16.msra.mxu0 0
    %429 = vmatprep.subr.bf16.mxu0 0
    %430 = vmatpush1.bf16.msra.mxu0 0
    %431 = vmatprep.subr.bf16.mxu0 0
    %432 = vmatpush1.bf16.msra.mxu0 0
    %433 = vmatprep.subr.bf16.mxu0 0
    %434 = vmatpush1.bf16.msra.mxu0 0
    %435 = vmatprep.subr.bf16.mxu0 0
    %436 = vmatpush1.bf16.msra.mxu0 0
    %437 = vmatprep.subr.bf16.mxu0 0
    %438 = vmatpush1.bf16.msra.mxu0 0
    %439 = vmatprep.subr.bf16.mxu0 0
    %440 = vmatpush1.bf16.msra.mxu0 0
    %441 = vmatprep.subr.bf16.mxu0 0
    %442 = vmatpush1.bf16.msra.mxu0 0
    %443 = vmatprep.mubr.bf16.mxu0 0
    %444 = vmatmul.mubr.bf16.gmra.mrb[0].mxu0 %v339
    %v445 = vpop.f32.mrb[0].mxu0
    %v446 = vadd.f32 %v361, %v445
    %v447 = vpop.f32.mrb[0].mxu0
    %v448 = vpop.f32.mrb[0].mxu0
    %v449 = vadd.f32 %v361, %v448
    %v450 = vpop.f32.mrb[0].mxu0
    %451 = vdwg.mxu0
    %v452 = vmax.f32 %v446, 0.0
    %v453 = vmax.f32 %v449, 0.0
    %v454 = vpack.c.bf16 %v453, %v452
    %v455 = vld [vmem:[#allocation10] sm:$0xf]
    %v456 = vld [vmem:[#allocation10 + $0x4] sm:$0xf]
    %v457 = vld [vmem:[#allocation10 + $0x8] sm:$0xf]
    %v458 = vld [vmem:[#allocation10 + $0xc] sm:$0xf]
    %v459 = vld [vmem:[#allocation10 + $0x10] sm:$0xf]
    %v460 = vld [vmem:[#allocation10 + $0x14] sm:$0xf]
    %v461 = vld [vmem:[#allocation10 + $0x18] sm:$0xf]
    %v462 = vld [vmem:[#allocation10 + $0x1c] sm:$0xf]
    %v463 = vld [vmem:[#allocation10 + $0x20] sm:$0xf]
    %v464 = vld [vmem:[#allocation10 + $0x24] sm:$0xf]
    %v465 = vld [vmem:[#allocation10 + $0x28] sm:$0xf]
    %v466 = vld [vmem:[#allocation10 + $0x2c] sm:$0xf]
    %v467 = vld [vmem:[#allocation10 + $0x30] sm:$0xf]
    %v468 = vld [vmem:[#allocation10 + $0x34] sm:$0xf]
    %v469 = vld [vmem:[#allocation10 + $0x38] sm:$0xf]
    %v470 = vld [vmem:[#allocation10 + $0x3c] sm:$0xf]
    %v471 = vld [vmem:[%s8] sm:$0x1]
    %v473 = vlaneseq
    %v474 = vshrl.u32 %v473, 7
    %v475 = vsub.s32 0, %v474
    %v476 = vrot.slane %v471, %v475
    %v494 = vunpack.c.l.b16 %v455
    %v495 = vunpack.c.l.b16 %v456
    %v496 = vunpack.c.l.b16 %v457
    %v497 = vunpack.c.l.b16 %v458
    %v498 = vunpack.c.l.b16 %v459
    %v499 = vunpack.c.l.b16 %v460
    %v500 = vunpack.c.l.b16 %v461
    %v501 = vunpack.c.l.b16 %v462
    %v502 = vunpack.c.l.b16 %v463
    %v503 = vunpack.c.l.b16 %v464
    %v504 = vunpack.c.l.b16 %v465
    %v505 = vunpack.c.l.b16 %v466
    %v506 = vunpack.c.l.b16 %v467
    %v507 = vunpack.c.l.b16 %v468
    %v508 = vunpack.c.l.b16 %v469
    %v509 = vunpack.c.l.b16 %v470
    %v510 = vpack.c.b16 %v495, %v494
    %v511 = vpack.c.b16 %v497, %v496
    %v512 = vpack.c.b16 %v499, %v498
    %v513 = vpack.c.b16 %v501, %v500
    %v514 = vpack.c.b16 %v503, %v502
    %v515 = vpack.c.b16 %v505, %v504
    %v516 = vpack.c.b16 %v507, %v506
    %v517 = vpack.c.b16 %v509, %v508
    %526 = vmatprep.subr.bf16.mxu0 0
    %527 = vmatpush1.bf16.msra.mxu0 %v510
    %528 = vmatprep.subr.bf16.mxu0 0
    %529 = vmatpush1.bf16.msra.mxu0 %v511
    %530 = vmatprep.subr.bf16.mxu0 0
    %531 = vmatpush1.bf16.msra.mxu0 %v512
    %532 = vmatprep.subr.bf16.mxu0 0
    %533 = vmatpush1.bf16.msra.mxu0 %v513
    %534 = vmatprep.subr.bf16.mxu0 0
    %535 = vmatpush1.bf16.msra.mxu0 %v514
    %536 = vmatprep.subr.bf16.mxu0 0
    %537 = vmatpush1.bf16.msra.mxu0 %v515
    %538 = vmatprep.subr.bf16.mxu0 0
    %539 = vmatpush1.bf16.msra.mxu0 %v516
    %540 = vmatprep.subr.bf16.mxu0 0
    %541 = vmatpush1.bf16.msra.mxu0 %v517
    %542 = vmatprep.subr.bf16.mxu0 0
    %543 = vmatpush1.bf16.msra.mxu0 0
    %544 = vmatprep.subr.bf16.mxu0 0
    %545 = vmatpush1.bf16.msra.mxu0 0
    %546 = vmatprep.subr.bf16.mxu0 0
    %547 = vmatpush1.bf16.msra.mxu0 0
    %548 = vmatprep.subr.bf16.mxu0 0
    %549 = vmatpush1.bf16.msra.mxu0 0
    %550 = vmatprep.subr.bf16.mxu0 0
    %551 = vmatpush1.bf16.msra.mxu0 0
    %552 = vmatprep.subr.bf16.mxu0 0
    %553 = vmatpush1.bf16.msra.mxu0 0
    %554 = vmatprep.subr.bf16.mxu0 0
    %555 = vmatpush1.bf16.msra.mxu0 0
    %556 = vmatprep.subr.bf16.mxu0 0
    %557 = vmatpush1.bf16.msra.mxu0 0
    %558 = vmatprep.mubr.bf16.mxu0 0
    %559 = vmatmul.mubr.bf16.gmra.mrb[0].mxu0 %v454
    %v560 = vpop.f32.mrb[0].mxu0
    %v561 = vadd.f32 %v476, %v560
    %v562 = vpop.f32.mrb[0].mxu0
    %v563 = vpop.f32.mrb[0].mxu0
    %v564 = vadd.f32 %v476, %v563
    %v565 = vpop.f32.mrb[0].mxu0
    %566 = vdwg.mxu0
    %v567 = vpack.c.bf16 %v564, %v561
    %v569 = vunpack.c.l.b16 %v567
    %v570 = vunpack.c.h.b16 %v567
    %v571 = vpack.c.b16 %v569, %v569
    %v572 = vpack.c.b16 %v570, %v570
    %575 = vst [vmem:[#allocation11] sm:$0xf] %v571
    %576 = vst [vmem:[#allocation11 + $0x4] sm:$0xf] %v572
    // Predicated region
    $region58: #{tpu_custom_call.1} parent=1 // pred_check
      _
    $region59: #{tpu_custom_call.1} parent=1 // pred_check_branch
      %578 = sbr.rel (0) target = $region61
    $region60: #{tpu_custom_call.1} parent=1 // pred_region
      %s580 = ssub.s32 128, 128
      %581 = vsyncadd [#allocation4], %s580
      %s582 = sshll.u32 [#allocation11], 4
      %s583 = int_to_ptr.vmem [resolvable:$true] %s582
      %588 = dma.vmem_to_hbm [thread:$0]  %s583, 128, %s9, [#allocation4], 64, 64, 4
    $region61: #{tpu_custom_call.1} parent=1 // pred_fallthru
      _
    // Predicated region
    $region62: #{tpu_custom_call.1} parent=1 // pred_check
      _
    $region63: #{tpu_custom_call.1} parent=1 // pred_check_branch
      %590 = sbr.rel (0) target = $region65
    $region64: #{tpu_custom_call.1} parent=1 // pred_region
      %591 = dma.done [#allocation4], 128
    $region65: #{tpu_custom_call.1} parent=1 // pred_fallthru
      _
    %592 = vsyncpa [#allocation3], 1
    %593 = vsyncpa [#allocation6], 1
    %594 = vsyncpa [#allocation9], 1
    %595 = vsyncpa [#allocation4], 1

</llo_original>
